<compile_context>
chip_gen: v7x
topology: tpu7x:2x2x1
jax: 0.10.0
libtpu: 0.0.40
codegen_flags: <defaults>
</compile_context>

<pallas_src>
import numpy as np
import jax
import jax.numpy as jnp
from jax.experimental import pallas as pl
from jax.experimental.pallas import tpu as pltpu


def _round_up(v: int, m: int) -> int:
    return ((v + m - 1) // m) * m


def _sublane_multiple(dtype) -> int:
    # f32 -> 8, bf16 -> 16, int8 -> 32 (packed sublanes)
    itemsize = jnp.dtype(dtype).itemsize
    return max(8, 32 // max(1, itemsize))


def _vmem_budget():
    """Per-tile byte budget and explicit scoped-VMEM limit for this chip."""
    cap = 64 << 20  # conservative default (v7x physical VMEM per TC)
    try:
        info = pltpu.get_tpu_info()
        cap = int(getattr(info, "vmem_capacity_bytes", cap))
    except Exception:
        pass
    # ~8 MiB tiles (v7x: 6-8 MiB, v6e: 8-16 MiB, v5e: 4-8 MiB recommended).
    tile_budget = max(1 << 20, min(8 << 20, cap // 8))
    # 4-buffer (in+out, double-buffered) footprint ~4*tile; leave headroom.
    vmem_limit = int(min(cap * 3 // 4, 64 << 20))
    return tile_budget, vmem_limit


def _choose_block_rows(nc: int, row_bytes: int, sub: int, budget_bytes: int) -> int:
    """Sublane-aligned rows-per-block from the VMEM budget (cdiv grid; no need
    for cb to divide nc).  Prefers >= 2 grid steps so both v7x TCs stay busy."""
    if nc <= sub:
        return nc  # block dim == full array dim (always layout-legal)
    cb = (budget_bytes // max(1, row_bytes)) // sub * sub
    cb = max(sub, cb)
    if cb >= nc:
        # Budget allows the whole thing in one step -> split into ~2 steps.
        cb = _round_up(-(-nc // 2), sub)  # ceil(nc/2) rounded up to sublanes
    return cb


def make_shift3d(shift, *, force_time_blocked: bool = False):
    """Returns a callable implementing Shift3d(shift).forward for NCTHW inputs.

    force_time_blocked=True forces the T-blocked kernel (Path B) even for small
    rows; used for testing the large-row code path at small shapes.
    """
    horz, vert, time = shift
    ta, ya, xa = abs(time), abs(vert), abs(horz)

    def shift3d(x):
        N, C, T, H, W = x.shape

        # Shift >= dim: pad-then-crop leaves only zeros.
        if ta >= T or ya >= H or xa >= W:
            return jnp.zeros_like(x)
        # Zero shift: identity.
        if ta == 0 and ya == 0 and xa == 0:
            return x

        NC, HW, L = N * C, H * W, T * H * W
        itemsize = jnp.dtype(x.dtype).itemsize
        sub = _sublane_multiple(x.dtype)
        tile_budget, vmem_limit = _vmem_budget()
        bytes_accessed = 2 * x.size * itemsize  # pure bandwidth

        use_time_blocked = force_time_blocked or (
            min(NC, sub) * L * itemsize > tile_budget
        )

        if not use_time_blocked:
            # ---------------- Path A: flattened (NC, L) roll + mask ----------------
            D = ta * HW + ya * W + xa  # flattened shift along (T*H*W)

            # Validity mask (0/1 in x.dtype) over the flattened axis, built at
            # trace time with numpy (no in-kernel int div/mod).
            q = np.arange(L)
            valid = (((q // HW) >= ta)
                     & (((q // W) % H) >= ya)
                     & ((q % W) >= xa))
            mask = jnp.asarray(valid.astype(np.dtype(x.dtype))).reshape(1, L)

            cb = _choose_block_rows(NC, L * itemsize, sub, tile_budget)
            grid = (pl.cdiv(NC, cb),)

            def kernel_a(mask_ref, x_ref, o_ref):
                # Roll the flattened row by D (XLU), zero invalid positions with
                # a single vmul, then one lane-dense full-tile store.
                v = pltpu.roll(x_ref[...], shift=D, axis=1)
                o_ref[...] = v * mask_ref[...]

            out2 = pl.pallas_call(
                kernel_a,
                out_shape=jax.ShapeDtypeStruct((NC, L), x.dtype),
                grid=grid,
                in_specs=[
                    pl.BlockSpec((1, L), lambda i: (0, 0)),    # mask (broadcast)
                    pl.BlockSpec((cb, L), lambda i: (i, 0)),   # x slab
                ],
                out_specs=pl.BlockSpec((cb, L), lambda i: (i, 0)),
                compiler_params=pltpu.CompilerParams(
                    dimension_semantics=("parallel",),
                    vmem_limit_bytes=vmem_limit,
                ),
                cost_estimate=pl.CostEstimate(
                    flops=0, transcendentals=0, bytes_accessed=bytes_accessed,
                ),
            )(mask, x.reshape(NC, L))
            return out2.reshape(N, C, T, H, W)

        # ---------------- Path B: (NC, T, HW) with a grid axis over T ----------------
        # Time shift handled by the (clamped) input index_map + pl.when zero-fill;
        # only the spatial part needs a roll + mask.
        # TODO(synk): for enormous single planes (H*W*itemsize alone >> budget) a
        # further H-axis blocking would be needed; not implemented here.
        d_sp = ya * W + xa
        use_mask = d_sp != 0

        cb = _choose_block_rows(NC, HW * itemsize, sub, tile_budget)
        grid = (pl.cdiv(NC, cb), T)

        if ta > 0:
            x_map = lambda i, t: (i, jnp.maximum(t - ta, 0), 0)
        else:
            x_map = lambda i, t: (i, t, 0)

        def kernel_b(*refs):
            if use_mask:
                mask_ref, x_ref, o_ref = refs
            else:
                x_ref, o_ref = refs

            def compute():
                v = x_ref[...]
                if d_sp != 0:
                    v = pltpu.roll(v, shift=d_sp, axis=1)
                if use_mask:
                    v = v * mask_ref[...]
                o_ref[...] = v

            if ta == 0:
                compute()
            else:
                t = pl.program_id(1)

                @pl.when(t < ta)
                def _():
                    o_ref[...] = jnp.zeros_like(o_ref)

                @pl.when(t >= ta)
                def _():
                    compute()

        in_specs = []
        args = []
        if use_mask:
            q = np.arange(HW)
            valid_sp = ((q // W) >= ya) & ((q % W) >= xa)
            mask_sp = jnp.asarray(valid_sp.astype(np.dtype(x.dtype))).reshape(1, HW)
            in_specs.append(pl.BlockSpec((1, HW), lambda i, t: (0, 0)))
            args.append(mask_sp)
        # T dim squeezed (None) so the kernel ref is a clean (cb, HW) 2-D tile.
        in_specs.append(pl.BlockSpec((cb, None, HW), x_map))
        args.append(x.reshape(NC, T, HW))

        out3 = pl.pallas_call(
            kernel_b,
            out_shape=jax.ShapeDtypeStruct((NC, T, HW), x.dtype),
            grid=grid,
            in_specs=in_specs,
            out_specs=pl.BlockSpec((cb, None, HW), lambda i, t: (i, t, 0)),
            compiler_params=pltpu.CompilerParams(
                dimension_semantics=("parallel", "parallel"),
                vmem_limit_bytes=vmem_limit,
            ),
            cost_estimate=pl.CostEstimate(
                flops=0, transcendentals=0, bytes_accessed=bytes_accessed,
            ),
        )(*args)
        return out3.reshape(N, C, T, H, W)

    return shift3d


def shift3d_reference(x, shift):
    """Pure-JAX reference: ConstantPad3d then Crop3d, exactly as in the module."""
    horz, vert, time = shift
    ta, ya, xa = abs(time), abs(vert), abs(horz)
    N, C, T, H, W = x.shape
    padded = jnp.pad(
        x, ((0, 0), (0, 0), (ta, 0), (ya, 0), (xa, 0)), mode="constant"
    )
    return padded[:, :, :T, :H, :W]


if __name__ == "__main__":
    key = jax.random.PRNGKey(0)
    # Small NCTHW input: batch=2, channels=4, T=4, H=8, W=16  (NC=8, L=512)
    x = jax.random.normal(key, (2, 4, 4, 8, 16), dtype=jnp.float32)

    cases = [
        ((1, 2, 1), False),    # generic positive shift (Path A)
        ((-2, 1, 0), False),   # negative component -> abs() (Path A)
        ((0, 0, 0), False),    # identity fast path
        ((1, 0, 5), False),    # time shift >= T -> all zeros fast path
        ((1, 2, 1), True),     # forced T-blocked path (Path B) with spatial roll
        ((0, 0, 2), True),     # pure time shift on Path B: no roll, no mask
    ]
    for s, forced in cases:
        fn = jax.jit(make_shift3d(s, force_time_blocked=forced))
        y = jax.block_until_ready(fn(x))
        y_ref = shift3d_reference(x, s)
        assert y.shape == x.shape
        assert jnp.allclose(y, y_ref), f"Shift3d mismatch: shift={s} forced={forced}"

    # Ragged shapes: L % 128 != 0 and NC not a multiple of the sublane count.
    x2 = jax.random.normal(jax.random.PRNGKey(0), (1, 3, 3, 5, 12), dtype=jnp.float32)
    for s, forced in [((1, 1, 2), False), ((2, 1, 1), True)]:
        fn = jax.jit(make_shift3d(s, force_time_blocked=forced))
        y = jax.block_until_ready(fn(x2))
        assert jnp.allclose(y, shift3d_reference(x2, s)), \
            f"Shift3d ragged mismatch: shift={s} forced={forced}"

    # bf16 (sublane multiple 16) on Path A.
    x3 = x.astype(jnp.bfloat16)
    y = jax.block_until_ready(jax.jit(make_shift3d((1, 1, 1)))(x3))
    assert jnp.allclose(
        y.astype(jnp.float32),
        shift3d_reference(x3, (1, 1, 1)).astype(jnp.float32),
    ), "Shift3d bf16 mismatch"

    print("KERNEL_OK")
</pallas_src>

<mosaic_0001>
module attributes {stable_mosaic.version = 11 : i64} {
  func.func @kernel_a(%arg0: i32, %arg1: memref<1x512xf32, #tpu.memory_space<vmem>>, %arg2: memref<8x512xf32, #tpu.memory_space<vmem>>, %arg3: memref<8x512xf32, #tpu.memory_space<vmem>>) attributes {dimension_semantics = [#tpu.dimension_semantics<parallel>], iteration_bounds = array<i64: 1>, scalar_prefetch = 0 : i64, scratch_operands = 0 : i64, tpu.core_type = #tpu.core_type<tc>, window_params = [{pipeline_mode = #tpu.pipeline_mode<synchronous>, transform_indices = @transform_0, window_bounds = array<i64: 1, 512>}, {transform_indices = @transform_1, window_bounds = array<i64: 8, 512>}, {transform_indices = @transform_2, window_bounds = array<i64: 8, 512>}]} {
    %c0 = arith.constant 0 : index
    %c0_0 = arith.constant 0 : index
    %0 = vector.load %arg2[%c0, %c0_0] : memref<8x512xf32, #tpu.memory_space<vmem>>, vector<8x512xf32>
    %c161_i32 = arith.constant 161 : i32
    %1 = tpu.dynamic_rotate %0 by %c161_i32 dim 1 : vector<8x512xf32>, i32 -> vector<8x512xf32>
    %c0_1 = arith.constant 0 : index
    %c0_2 = arith.constant 0 : index
    %2 = vector.load %arg1[%c0_1, %c0_2] : memref<1x512xf32, #tpu.memory_space<vmem>>, vector<1x512xf32>
    %3 = vector.broadcast %2 : vector<1x512xf32> to vector<8x512xf32>
    %4 = arith.mulf %1, %3 : vector<8x512xf32>
    %c0_3 = arith.constant 0 : index
    %c0_4 = arith.constant 0 : index
    %5 = vector.load %arg3[%c0_3, %c0_4] : memref<8x512xf32, #tpu.memory_space<vmem>>, vector<8x512xf32>
    tpu.vector_store %arg3[%c0_3, %c0_4], %4 {strides = array<i32>} : memref<8x512xf32, #tpu.memory_space<vmem>>, vector<8x512xf32>,
    return
  }
  func.func @transform_0(%arg0: i32) -> (i32, i32) {
    %c0_i32 = arith.constant 0 : i32
    %c0_i32_0 = arith.constant 0 : i32
    %c0_i32_1 = arith.constant 0 : i32
    return %c0_i32, %c0_i32_0 : i32, i32
  }
  func.func @transform_1(%arg0: i32) -> (i32, i32) {
    %c0_i32 = arith.constant 0 : i32
    %c0_i32_0 = arith.constant 0 : i32
    return %arg0, %c0_i32 : i32, i32
  }
  func.func @transform_2(%arg0: i32) -> (i32, i32) {
    %c0_i32 = arith.constant 0 : i32
    %c0_i32_0 = arith.constant 0 : i32
    return %arg0, %c0_i32 : i32, i32
  }
}

</mosaic_0001>

<llo_original>
// kernel: shift3d.1
$region0: #{shift3d.1}
  #allocation0 [shape = 'u32[]', space=smem, size = 0x4, offset = 0x4, fixed_abs, tag = 'smem constant byte address 0x4 - core index']
  #allocation1 [shape = 'u32[144,128]{1,0:T(1,128)}', space=vmem, size = 0x12000, scoped, tag = 'internal scratch']
  %s0 = inlined_call_operand.vmem [shape: f32[1,512], index: 0, kind: input, shape index: {}]
  %s1 = inlined_call_operand.vmem [shape: f32[8,512], index: 1, kind: input, shape index: {}]
  %s2 = inlined_call_operand.vmem [shape: f32[8,512], index: 2, kind: output, shape index: {}]
  %s3 = sld [smem:[#allocation0]]
  $region18: #{shift3d.1} parent=0
    _
  %s5 = ssub.s32 1, %s3
  %s6 = scalar_select 0, %s5, %s3
  // Predicated region
  $region2: #{shift3d.1} parent=0 // pred_check
    _
  $region3: #{shift3d.1} parent=0 // pred_check_branch
    %8 = sbr.rel (0) target = $region5
  $region4: #{shift3d.1} parent=0 // pred_region
    _
  $region5: #{shift3d.1} parent=0 // pred_fallthru
    _
  // Predicated region
  $region6: #{shift3d.1} parent=0 // pred_check
    _
  $region7: #{shift3d.1} parent=0 // pred_check_branch
    %10 = sbr.rel (0) target = $region9
  $region8: #{shift3d.1} parent=0 // pred_region
    _
  $region9: #{shift3d.1} parent=0 // pred_fallthru
    _
  %v11 = vld [vmem:[%s1] sm:$0xff]
  %v12 = vld [vmem:[%s1 + $0x8] sm:$0xff]
  %v13 = vld [vmem:[%s1 + $0x10] sm:$0xff]
  %v14 = vld [vmem:[%s1 + $0x18] sm:$0xff]
  %15 = vrot.lane.b32.xlu0 %v11, 33
  %v16 = vpop.permute.xlu0 %15
  %17 = vrot.lane.b32.xlu0 %v12, 33
  %v18 = vpop.permute.xlu0 %17
  %19 = vrot.lane.b32.xlu0 %v13, 33
  %v20 = vpop.permute.xlu0 %19
  %21 = vrot.lane.b32.xlu0 %v14, 33
  %v22 = vpop.permute.xlu0 %21
  %v23 = vlaneseq
  %v24 = vand.u32 %v23, 127
  %vm25 = vcmp.lt.s32.totalorder %v24, 33
  %v26 = vsel %vm25, %v20, %v22
  %v27 = vsel %vm25, %v18, %v20
  %v28 = vsel %vm25, %v16, %v18
  %v29 = vsel %vm25, %v22, %v16
  %v30 = vld [vmem:[%s0] sm:$0xf]
  %v32 = vlaneseq
  %v33 = vshrl.u32 %v32, 7
  %v34 = vsub.s32 0, %v33
  %v35 = vrot.slane %v30, %v34
  %v36 = vlaneseq
  %v37 = vshrl.u32 %v36, 7
  %v38 = vsub.s32 1, %v37
  %v39 = vrot.slane %v30, %v38
  %v40 = vlaneseq
  %v41 = vshrl.u32 %v40, 7
  %v42 = vsub.s32 2, %v41
  %v43 = vrot.slane %v30, %v42
  %v44 = vlaneseq
  %v45 = vshrl.u32 %v44, 7
  %v46 = vsub.s32 3, %v45
  %v47 = vrot.slane %v30, %v46
  %v52 = vmul.f32 %v26, %v35
  %v53 = vmul.f32 %v29, %v39
  %v54 = vmul.f32 %v28, %v43
  %v55 = vmul.f32 %v27, %v47
  %56 = vst [vmem:[%s2] sm:$0xff] %v52
  %57 = vst [vmem:[%s2 + $0x8] sm:$0xff] %v53
  %58 = vst [vmem:[%s2 + $0x10] sm:$0xff] %v54
  %59 = vst [vmem:[%s2 + $0x18] sm:$0xff] %v55
  // Predicated region
  $region10: #{shift3d.1} parent=0 // pred_check
    _
  $region11: #{shift3d.1} parent=0 // pred_check_branch
    %61 = sbr.rel (0) target = $region13
  $region12: #{shift3d.1} parent=0 // pred_region
    _
  $region13: #{shift3d.1} parent=0 // pred_fallthru
    _
  // Predicated region
  $region14: #{shift3d.1} parent=0 // pred_check
    _
  $region15: #{shift3d.1} parent=0 // pred_check_branch
    %63 = sbr.rel (0) target = $region17
  $region16: #{shift3d.1} parent=0 // pred_region
    _
  $region17: #{shift3d.1} parent=0 // pred_fallthru
    _

</llo_original>
